<compile_context>
chip_gen: v6e
topology: v6e:2x2x1
jax: 0.10.0
libtpu: 0.0.40
codegen_flags: <defaults>
</compile_context>

<pallas_src>
import functools

import numpy as np
import jax
import jax.numpy as jnp
from jax import lax
from jax.experimental import pallas as pl
from jax.experimental.pallas import tpu as pltpu


# ----------------------------------------------------------------------------
# Fused kernel: one grid step per batch element.
# ----------------------------------------------------------------------------
def _csam_fused_kernel(x_ref, lca_ref, w1t_ref, w2_ref, wl_ref, bl_ref,
                       asa_ref, up_ref, bsa_ref, out_ref):
    # x_ref   : (1, C, HW)   f32  input features, HW lane-dense
    # lca_ref : (1, 2C, hw)  bf16 low-res features (hw = HW/4)
    # w1t_ref : (C, Cr)      f32  SE layer-1 weight, transposed (C in sublanes)
    # w2_ref  : (C, Cr)      f32  SE layer-2 weight
    # wl_ref  : (C, 2C)      bf16 convl 1x1 weight
    # bl_ref  : (C, 1)       f32  convl bias
    # asa_ref : (2*HW, HW)   bf16 merged SA-conv operator ([max-rows; mean-rows])
    # up_ref  : (hw, HW)     bf16 bilinear x2 upsample operator (kron(Uh,Uw)^T)
    # bsa_ref : SMEM (1,)    f32  SA conv bias
    # out_ref : (1, C, HW)   f32
    x2 = x_ref[0]                                              # (C, HW) f32
    C, HW = x2.shape

    # --- channel attention: global max/avg pool + shared SE MLP (VPU path) --
    cmax = jnp.max(x2, axis=1, keepdims=True)                  # (C, 1)
    cavg = jnp.sum(x2, axis=1, keepdims=True) * (1.0 / HW)     # (C, 1)
    w1t = w1t_ref[...]                                         # (C, Cr)
    w2 = w2_ref[...]                                           # (C, Cr)
    h_max = jnp.maximum(jnp.sum(w1t * cmax, axis=0, keepdims=True), 0.0)  # (1,Cr)
    h_avg = jnp.maximum(jnp.sum(w1t * cavg, axis=0, keepdims=True), 0.0)  # (1,Cr)
    o_max = jnp.sum(w2 * h_max, axis=1, keepdims=True)         # (C, 1)
    o_avg = jnp.sum(w2 * h_avg, axis=1, keepdims=True)         # (C, 1)
    ca = jax.nn.sigmoid(o_max + o_avg)                         # (C, 1)
    scaled = x2 * ca                                           # (C, HW)

    # --- spatial attention: 49x49 conv as ONE merged MXU matmul -------------
    smax = jnp.max(scaled, axis=0, keepdims=True)              # (1, HW)
    smean = jnp.sum(scaled, axis=0, keepdims=True) * (1.0 / C)  # (1, HW)
    s = jnp.concatenate([smax, smean], axis=1).astype(jnp.bfloat16)  # (1, 2HW)
    sa_logit = (jnp.dot(s, asa_ref[...], preferred_element_type=jnp.float32)
                + bsa_ref[0])                                  # (1, HW) f32
    sa = jax.nn.sigmoid(sa_logit)                              # (1, HW)

    # --- lca branch: convl (1x1) + bilinear x2 upsample (two MXU matmuls) ---
    z = jnp.dot(wl_ref[...], lca_ref[0],
                preferred_element_type=jnp.float32) + bl_ref[...]   # (C, hw) f32
    up = jnp.dot(z.astype(jnp.bfloat16), up_ref[...],
                 preferred_element_type=jnp.float32)           # (C, HW) f32

    # --- fused combine, lane-dense full-width store --------------------------
    out_ref[0] = scaled * sa + x2 + up


# ----------------------------------------------------------------------------
# Bilinear (align_corners=False) x2 upsample operator, PyTorch semantics.
# ----------------------------------------------------------------------------
def bilinear_up_matrix(n):
    m = np.zeros((2 * n, n), np.float32)
    for i in range(2 * n):
        src = max(0.5 * i - 0.25, 0.0)
        i0 = int(np.floor(src))
        i1 = min(i0 + 1, n - 1)
        lam = src - i0
        m[i, i0] += 1.0 - lam
        m[i, i1] += lam
    return m


# ----------------------------------------------------------------------------
# Host-side (numpy) operator construction.  Call ONCE per weight update and
# pass the result to `csam_block432`; the jitted forward never rebuilds them.
# Zero padding of the KxK (2->1) conv is folded into the operator; the max and
# mean operators are stacked along the contraction axis so the kernel does a
# single (1, 2HW) @ (2HW, HW) matmul.
# ----------------------------------------------------------------------------
def build_csam_operators(w_sa, H, W, kernel_size, *, op_dtype=jnp.bfloat16):
    K = kernel_size
    P = K // 2
    w0 = np.asarray(w_sa, np.float32)[0]              # (2, K, K)
    HW = H * W
    iy = np.arange(H)
    ix = np.arange(W)
    ky = iy[:, None] - iy[None, :] + P                # (H_in, H_out)
    kx = ix[:, None] - ix[None, :] + P                # (W_in, W_out)
    vy = (ky >= 0) & (ky < K)
    vx = (kx >= 0) & (kx < K)
    kyc = np.clip(ky, 0, K - 1)
    kxc = np.clip(kx, 0, K - 1)
    # a[c, yi, xi, yo, xo] = w0[c, yi-yo+P, xi-xo+P]  (0 outside the kernel).
    a = w0[:, kyc[:, None, :, None], kxc[None, :, None, :]]   # (2, H, W, H, W)
    valid = (vy[:, None, :, None] & vx[None, :, None, :])[None]
    a = np.where(valid, a, np.float32(0.0)).reshape(2, HW, HW).astype(np.float32)
    # Rows [0:HW] act on the channel-max map, rows [HW:2HW] on the mean map —
    # must match the kernel-side concat order [smax, smean].
    a_sa = np.concatenate([a[0], a[1]], axis=0)        # (2*HW, HW)

    h, w = H // 2, W // 2
    Uh = bilinear_up_matrix(h)                         # (H, h)
    Uw = bilinear_up_matrix(w)                         # (W, w)
    m_up = np.kron(Uh, Uw).T                           # (hw, HW)
    # TODO(synk): for large spatial sizes switch the SA-conv / upsample
    # operators to separable (per-axis / Toeplitz) tiled form — O((HW)^2)
    # storage hits v7x's 64 MiB VMEM at half the spatial size of v5e/v6e.
    return dict(a_sa=jnp.asarray(a_sa, op_dtype),
                m_up=jnp.asarray(m_up, op_dtype))


# ----------------------------------------------------------------------------
# Wrapper (the jit-compiled forward).
# ----------------------------------------------------------------------------
def csam_block432(x, lca_down, params, ops):
    B, C, H, W = x.shape
    HW = H * W
    _, C2, h, w = lca_down.shape
    assert C2 == 2 * C and 2 * h == H and 2 * w == W
    hw = h * w

    w1, w2 = params["w1"], params["w2"]              # (Cr, C), (C, Cr)
    wl, bl = params["wl"], params["bl"]              # (C, 2C), (C,)
    b_sa = params["b_sa"]                            # (1,)
    Cr = w1.shape[0]
    a_sa, m_up = ops["a_sa"], ops["m_up"]
    assert a_sa.shape == (2 * HW, HW) and m_up.shape == (hw, HW)

    # Lane-dense layouts (free, contiguous reshapes); bf16 MXU operands.
    x_flat = x.reshape(B, C, HW).astype(jnp.float32)
    lca_flat = lca_down.reshape(B, 2 * C, hw).astype(jnp.bfloat16)
    wl_bf = wl.astype(jnp.bfloat16)

    # Weight/operator streams use constant index maps, so they are fetched
    # once across grid steps.  (pipeline_mode=pl.Buffered(1) would also drop
    # their second VMEM buffer — useful headroom when the operators grow, but
    # unnecessary at these shapes: total VMEM footprint is <1.5 MiB.)
    out_flat = pl.pallas_call(
        _csam_fused_kernel,
        grid=(B,),
        in_specs=[
            pl.BlockSpec((1, C, HW), lambda b: (b, 0, 0)),
            pl.BlockSpec((1, 2 * C, hw), lambda b: (b, 0, 0)),
            pl.BlockSpec((C, Cr), lambda b: (0, 0)),
            pl.BlockSpec((C, Cr), lambda b: (0, 0)),
            pl.BlockSpec((C, 2 * C), lambda b: (0, 0)),
            pl.BlockSpec((C, 1), lambda b: (0, 0)),
            pl.BlockSpec((2 * HW, HW), lambda b: (0, 0)),
            pl.BlockSpec((hw, HW), lambda b: (0, 0)),
            pl.BlockSpec(memory_space=pltpu.MemorySpace.SMEM),
        ],
        out_specs=pl.BlockSpec((1, C, HW), lambda b: (b, 0, 0)),
        out_shape=jax.ShapeDtypeStruct((B, C, HW), jnp.float32),
        # grid=(B,) "parallel": one batch element per TensorCore on dual-TC
        # v7x.  On single-TC v5e/v6e the grid is a short serial loop
        # (~0.35us/step); fusing all of B into one step is the knob to pull
        # there if B grows.
        compiler_params=pltpu.CompilerParams(
            dimension_semantics=("parallel",)),
    )(x_flat, lca_flat,
      w1.T.astype(jnp.float32), w2.astype(jnp.float32),
      wl_bf, bl.reshape(C, 1).astype(jnp.float32),
      a_sa, m_up, b_sa.astype(jnp.float32))

    return out_flat.reshape(B, C, H, W)


# ----------------------------------------------------------------------------
# Pure-JAX reference (same math, same upsample operator), high precision f32.
# ----------------------------------------------------------------------------
def reference(x, lca_down, params, *, kernel_size=49):
    w1, w2, w_sa = params["w1"], params["w2"], params["w_sa"]
    B, C, H, W = x.shape
    K = kernel_size
    P = K // 2
    hp = lax.Precision.HIGHEST

    cmax = jnp.max(x, axis=(2, 3))
    cavg = jnp.mean(x, axis=(2, 3))

    def se(v):
        hidd = jnp.maximum(jnp.dot(v, w1.T, precision=hp), 0.0)
        return jnp.dot(hidd, w2.T, precision=hp)

    ca = jax.nn.sigmoid(se(cmax) + se(cavg))[:, :, None, None]
    out = x * ca

    smax = jnp.max(out, axis=1, keepdims=True)
    smean = jnp.mean(out, axis=1, keepdims=True)
    s = jnp.concatenate([smax, smean], axis=1)
    conv = lax.conv_general_dilated(
        s, w_sa, (1, 1), ((P, P), (P, P)),
        dimension_numbers=("NCHW", "OIHW", "NCHW"),
        precision=hp) + params["b_sa"][0]
    out = out * jax.nn.sigmoid(conv)

    z = jnp.einsum("oc,bchw->bohw", params["wl"], lca_down, precision=hp)
    z = z + params["bl"][None, :, None, None]
    hh, ww = lca_down.shape[2], lca_down.shape[3]
    Uh = jnp.asarray(bilinear_up_matrix(hh))
    Uw = jnp.asarray(bilinear_up_matrix(ww))
    up = jnp.einsum("ph,bchw,qw->bcpq", Uh, z, Uw, precision=hp)
    return out + x + up


if __name__ == "__main__":
    B, C, H, W = 2, 32, 16, 16
    reduction, K = 16, 49          # module defaults: reduction=16, kernel_size=49
    Cr = C // reduction

    key = jax.random.PRNGKey(0)
    k1, k2, k3, k4, k5, k6, k7, k8 = jax.random.split(key, 8)
    params = dict(
        w1=0.2 * jax.random.normal(k1, (Cr, C), jnp.float32),          # ca.se[0]
        w2=0.2 * jax.random.normal(k2, (C, Cr), jnp.float32),          # ca.se[2]
        w_sa=0.02 * jax.random.normal(k3, (1, 2, K, K), jnp.float32),  # sa.conv.w
        b_sa=0.1 * jax.random.normal(k4, (1,), jnp.float32),           # sa.conv.b
        wl=0.1 * jax.random.normal(k5, (C, 2 * C), jnp.float32),       # convl.w
        bl=0.1 * jax.random.normal(k6, (C,), jnp.float32),             # convl.b
    )
    x = jax.random.normal(k7, (B, C, H, W), jnp.float32)
    lca_down = jax.random.normal(k8, (B, 2 * C, H // 2, W // 2), jnp.float32)

    # Built once per weight update, host-side; NOT part of the jitted forward.
    ops = build_csam_operators(np.asarray(params["w_sa"]), H, W, K)

    fn = jax.jit(csam_block432)
    out = jax.block_until_ready(fn(x, lca_down, params, ops))

    ref = reference(x, lca_down, params, kernel_size=K)
    err = float(jnp.max(jnp.abs(out - ref)))
    assert out.shape == (B, C, H, W)
    # bf16 MXU inputs with f32 accumulation: ~1e-2 absolute on O(1..5) outputs.
    assert err < 2e-2, f"max abs err {err}"
    print("KERNEL_OK")
</pallas_src>

<mosaic_0001>
module attributes {stable_mosaic.version = 11 : i64} {
  func.func @_csam_fused_kernel(%arg0: i32, %arg1: memref<1x32x256xf32, #tpu.memory_space<vmem>>, %arg2: memref<1x64x64xbf16, #tpu.memory_space<vmem>>, %arg3: memref<32x2xf32, #tpu.memory_space<vmem>>, %arg4: memref<32x2xf32, #tpu.memory_space<vmem>>, %arg5: memref<32x64xbf16, #tpu.memory_space<vmem>>, %arg6: memref<32x1xf32, #tpu.memory_space<vmem>>, %arg7: memref<512x256xbf16, #tpu.memory_space<vmem>>, %arg8: memref<64x256xbf16, #tpu.memory_space<vmem>>, %arg9: memref<1xf32, #tpu.memory_space<smem>>, %arg10: memref<1x32x256xf32, #tpu.memory_space<vmem>>) attributes {dimension_semantics = [#tpu.dimension_semantics<parallel>], iteration_bounds = array<i64: 2>, scalar_prefetch = 0 : i64, scratch_operands = 0 : i64, tpu.core_type = #tpu.core_type<tc>, window_params = [{transform_indices = @transform_0, window_bounds = array<i64: 1, 32, 256>}, {transform_indices = @transform_1, window_bounds = array<i64: 1, 64, 64>}, {pipeline_mode = #tpu.pipeline_mode<synchronous>, transform_indices = @transform_2, window_bounds = array<i64: 32, 2>}, {pipeline_mode = #tpu.pipeline_mode<synchronous>, transform_indices = @transform_3, window_bounds = array<i64: 32, 2>}, {pipeline_mode = #tpu.pipeline_mode<synchronous>, transform_indices = @transform_4, window_bounds = array<i64: 32, 64>}, {pipeline_mode = #tpu.pipeline_mode<synchronous>, transform_indices = @transform_5, window_bounds = array<i64: 32, 1>}, {pipeline_mode = #tpu.pipeline_mode<synchronous>, transform_indices = @transform_6, window_bounds = array<i64: 512, 256>}, {pipeline_mode = #tpu.pipeline_mode<synchronous>, transform_indices = @transform_7, window_bounds = array<i64: 64, 256>}, {transform_indices = @transform_8, window_bounds = array<i64: 1>}, {transform_indices = @transform_9, window_bounds = array<i64: 1, 32, 256>}]} {
    %c0 = arith.constant 0 : index
    %c0_0 = arith.constant 0 : index
    %c0_1 = arith.constant 0 : index
    %0 = vector.load %arg1[%c0, %c0_0, %c0_1] : memref<1x32x256xf32, #tpu.memory_space<vmem>>, vector<1x32x256xf32>
    %1 = vector.shape_cast %0 : vector<1x32x256xf32> to vector<32x256xf32>
    %cst = arith.constant dense<0xFF800000> : vector<32xf32>
    %2 = vector.multi_reduction <maximumf>, %1, %cst [1] : vector<32x256xf32> to vector<32xf32>
    %3 = vector.shape_cast %2 : vector<32xf32> to vector<32x1xf32>
    %cst_2 = arith.constant dense<0.000000e+00> : vector<32xf32>
    %4 = vector.multi_reduction <add>, %1, %cst_2 [1] : vector<32x256xf32> to vector<32xf32>
    %5 = vector.shape_cast %4 : vector<32xf32> to vector<32x1xf32>
    %cst_3 = arith.constant 3.906250e-03 : f32
    %6 = vector.broadcast %cst_3 : f32 to vector<32x1xf32>
    %7 = arith.mulf %5, %6 : vector<32x1xf32>
    %c0_4 = arith.constant 0 : index
    %c0_5 = arith.constant 0 : index
    %8 = vector.load %arg3[%c0_4, %c0_5] : memref<32x2xf32, #tpu.memory_space<vmem>>, vector<32x2xf32>
    %c0_6 = arith.constant 0 : index
    %c0_7 = arith.constant 0 : index
    %9 = vector.load %arg4[%c0_6, %c0_7] : memref<32x2xf32, #tpu.memory_space<vmem>>, vector<32x2xf32>
    %10 = vector.broadcast %3 : vector<32x1xf32> to vector<32x2xf32>
    %11 = arith.mulf %8, %10 : vector<32x2xf32>
    %cst_8 = arith.constant dense<0.000000e+00> : vector<2xf32>
    %12 = vector.multi_reduction <add>, %11, %cst_8 [0] : vector<32x2xf32> to vector<2xf32>
    %13 = vector.shape_cast %12 : vector<2xf32> to vector<1x2xf32>
    %cst_9 = arith.constant 0.000000e+00 : f32
    %14 = vector.broadcast %cst_9 : f32 to vector<1x2xf32>
    %15 = arith.maximumf %13, %14 : vector<1x2xf32>
    %16 = vector.broadcast %7 : vector<32x1xf32> to vector<32x2xf32>
    %17 = arith.mulf %8, %16 : vector<32x2xf32>
    %cst_10 = arith.constant dense<0.000000e+00> : vector<2xf32>
    %18 = vector.multi_reduction <add>, %17, %cst_10 [0] : vector<32x2xf32> to vector<2xf32>
    %19 = vector.shape_cast %18 : vector<2xf32> to vector<1x2xf32>
    %cst_11 = arith.constant 0.000000e+00 : f32
    %20 = vector.broadcast %cst_11 : f32 to vector<1x2xf32>
    %21 = arith.maximumf %19, %20 : vector<1x2xf32>
    %22 = vector.broadcast %15 : vector<1x2xf32> to vector<32x2xf32>
    %23 = arith.mulf %9, %22 : vector<32x2xf32>
    %cst_12 = arith.constant dense<0.000000e+00> : vector<32xf32>
    %24 = vector.multi_reduction <add>, %23, %cst_12 [1] : vector<32x2xf32> to vector<32xf32>
    %25 = vector.shape_cast %24 : vector<32xf32> to vector<32x1xf32>
    %26 = vector.broadcast %21 : vector<1x2xf32> to vector<32x2xf32>
    %27 = arith.mulf %9, %26 : vector<32x2xf32>
    %cst_13 = arith.constant dense<0.000000e+00> : vector<32xf32>
    %28 = vector.multi_reduction <add>, %27, %cst_13 [1] : vector<32x2xf32> to vector<32xf32>
    %29 = vector.shape_cast %28 : vector<32xf32> to vector<32x1xf32>
    %30 = arith.addf %25, %29 : vector<32x1xf32>
    %31 = arith.negf %30 : vector<32x1xf32>
    %32 = math.exp %31 : vector<32x1xf32>
    %cst_14 = arith.constant 1.000000e+00 : f32
    %33 = vector.broadcast %cst_14 : f32 to vector<32x1xf32>
    %34 = arith.addf %33, %32 : vector<32x1xf32>
    %35 = arith.divf %33, %34 : vector<32x1xf32>
    %36 = vector.broadcast %35 : vector<32x1xf32> to vector<32x256xf32>
    %37 = arith.mulf %1, %36 : vector<32x256xf32>
    %cst_15 = arith.constant dense<0xFF800000> : vector<256xf32>
    %38 = vector.multi_reduction <maximumf>, %37, %cst_15 [0] : vector<32x256xf32> to vector<256xf32>
    %39 = vector.shape_cast %38 : vector<256xf32> to vector<1x256xf32>
    %cst_16 = arith.constant dense<0.000000e+00> : vector<256xf32>
    %40 = vector.multi_reduction <add>, %37, %cst_16 [0] : vector<32x256xf32> to vector<256xf32>
    %41 = vector.shape_cast %40 : vector<256xf32> to vector<1x256xf32>
    %cst_17 = arith.constant 3.125000e-02 : f32
    %42 = vector.broadcast %cst_17 : f32 to vector<1x256xf32>
    %43 = arith.mulf %41, %42 : vector<1x256xf32>
    %44 = tpu.concatenate %39, %43 in 1 : vector<1x256xf32>, vector<1x256xf32> -> vector<1x512xf32>
    %45 = arith.truncf %44 : vector<1x512xf32> to vector<1x512xbf16>
    %c0_18 = arith.constant 0 : index
    %c0_19 = arith.constant 0 : index
    %46 = vector.load %arg7[%c0_18, %c0_19] : memref<512x256xbf16, #tpu.memory_space<vmem>>, vector<512x256xbf16>
    %cst_20 = arith.constant dense<0.000000e+00> : vector<1x256xf32>
    %47 = tpu.matmul %45, %46, %cst_20 {dimension_numbers = #tpu.dot_dimension_numbers<[1], [0], [0], [1], [0, 0, 1, 1], [], []>} : vector<1x512xbf16>, vector<512x256xbf16>, vector<1x256xf32> -> vector<1x256xf32>
    %c0_21 = arith.constant 0 : index
    %48 = memref.load %arg9[%c0_21] : memref<1xf32, #tpu.memory_space<smem>>
    %49 = vector.broadcast %48 : f32 to vector<1x256xf32>
    %50 = arith.addf %47, %49 : vector<1x256xf32>
    %51 = arith.negf %50 : vector<1x256xf32>
    %52 = math.exp %51 : vector<1x256xf32>
    %cst_22 = arith.constant 1.000000e+00 : f32
    %53 = vector.broadcast %cst_22 : f32 to vector<1x256xf32>
    %54 = arith.addf %53, %52 : vector<1x256xf32>
    %55 = arith.divf %53, %54 : vector<1x256xf32>
    %c0_23 = arith.constant 0 : index
    %c0_24 = arith.constant 0 : index
    %56 = vector.load %arg5[%c0_23, %c0_24] : memref<32x64xbf16, #tpu.memory_space<vmem>>, vector<32x64xbf16>
    %c0_25 = arith.constant 0 : index
    %c0_26 = arith.constant 0 : index
    %c0_27 = arith.constant 0 : index
    %57 = vector.load %arg2[%c0_25, %c0_26, %c0_27] : memref<1x64x64xbf16, #tpu.memory_space<vmem>>, vector<1x64x64xbf16>
    %58 = vector.shape_cast %57 : vector<1x64x64xbf16> to vector<64x64xbf16>
    %cst_28 = arith.constant dense<0.000000e+00> : vector<32x64xf32>
    %59 = tpu.matmul %56, %58, %cst_28 {dimension_numbers = #tpu.dot_dimension_numbers<[1], [0], [0], [1], [0, 0, 1, 1], [], []>} : vector<32x64xbf16>, vector<64x64xbf16>, vector<32x64xf32> -> vector<32x64xf32>
    %c0_29 = arith.constant 0 : index
    %c0_30 = arith.constant 0 : index
    %60 = vector.load %arg6[%c0_29, %c0_30] : memref<32x1xf32, #tpu.memory_space<vmem>>, vector<32x1xf32>
    %61 = vector.broadcast %60 : vector<32x1xf32> to vector<32x64xf32>
    %62 = arith.addf %59, %61 : vector<32x64xf32>
    %63 = arith.truncf %62 : vector<32x64xf32> to vector<32x64xbf16>
    %c0_31 = arith.constant 0 : index
    %c0_32 = arith.constant 0 : index
    %64 = vector.load %arg8[%c0_31, %c0_32] : memref<64x256xbf16, #tpu.memory_space<vmem>>, vector<64x256xbf16>
    %cst_33 = arith.constant dense<0.000000e+00> : vector<32x256xf32>
    %65 = tpu.matmul %63, %64, %cst_33 {dimension_numbers = #tpu.dot_dimension_numbers<[1], [0], [0], [1], [0, 0, 1, 1], [], []>} : vector<32x64xbf16>, vector<64x256xbf16>, vector<32x256xf32> -> vector<32x256xf32>
    %66 = vector.broadcast %55 : vector<1x256xf32> to vector<32x256xf32>
    %67 = arith.mulf %37, %66 : vector<32x256xf32>
    %68 = arith.addf %67, %1 : vector<32x256xf32>
    %69 = arith.addf %68, %65 : vector<32x256xf32>
    %c0_34 = arith.constant 0 : index
    %c0_35 = arith.constant 0 : index
    %c0_36 = arith.constant 0 : index
    %70 = vector.load %arg10[%c0_34, %c0_35, %c0_36] : memref<1x32x256xf32, #tpu.memory_space<vmem>>, vector<1x32x256xf32>
    %71 = vector.shape_cast %70 : vector<1x32x256xf32> to vector<32x256xf32>
    %72 = vector.shape_cast %69 : vector<32x256xf32> to vector<1x32x256xf32>
    tpu.vector_store %arg10[%c0_34, %c0_35, %c0_36], %72 {strides = array<i32>} : memref<1x32x256xf32, #tpu.memory_space<vmem>>, vector<1x32x256xf32>,
    return
  }
  func.func @transform_0(%arg0: i32) -> (i32, i32, i32) {
    %c0_i32 = arith.constant 0 : i32
    %c0_i32_0 = arith.constant 0 : i32
    %c0_i32_1 = arith.constant 0 : i32
    return %arg0, %c0_i32, %c0_i32_0 : i32, i32, i32
  }
  func.func @transform_1(%arg0: i32) -> (i32, i32, i32) {
    %c0_i32 = arith.constant 0 : i32
    %c0_i32_0 = arith.constant 0 : i32
    %c0_i32_1 = arith.constant 0 : i32
    return %arg0, %c0_i32, %c0_i32_0 : i32, i32, i32
  }
  func.func @transform_2(%arg0: i32) -> (i32, i32) {
    %c0_i32 = arith.constant 0 : i32
    %c0_i32_0 = arith.constant 0 : i32
    %c0_i32_1 = arith.constant 0 : i32
    return %c0_i32, %c0_i32_0 : i32, i32
  }
  func.func @transform_3(%arg0: i32) -> (i32, i32) {
    %c0_i32 = arith.constant 0 : i32
    %c0_i32_0 = arith.constant 0 : i32
    %c0_i32_1 = arith.constant 0 : i32
    return %c0_i32, %c0_i32_0 : i32, i32
  }
  func.func @transform_4(%arg0: i32) -> (i32, i32) {
    %c0_i32 = arith.constant 0 : i32
    %c0_i32_0 = arith.constant 0 : i32
    %c0_i32_1 = arith.constant 0 : i32
    return %c0_i32, %c0_i32_0 : i32, i32
  }
  func.func @transform_5(%arg0: i32) -> (i32, i32) {
    %c0_i32 = arith.constant 0 : i32
    %c0_i32_0 = arith.constant 0 : i32
    %c0_i32_1 = arith.constant 0 : i32
    return %c0_i32, %c0_i32_0 : i32, i32
  }
  func.func @transform_6(%arg0: i32) -> (i32, i32) {
    %c0_i32 = arith.constant 0 : i32
    %c0_i32_0 = arith.constant 0 : i32
    %c0_i32_1 = arith.constant 0 : i32
    return %c0_i32, %c0_i32_0 : i32, i32
  }
  func.func @transform_7(%arg0: i32) -> (i32, i32) {
    %c0_i32 = arith.constant 0 : i32
    %c0_i32_0 = arith.constant 0 : i32
    %c0_i32_1 = arith.constant 0 : i32
    return %c0_i32, %c0_i32_0 : i32, i32
  }
  func.func @transform_8(%arg0: i32) -> i32 {
    %c0_i32 = arith.constant 0 : i32
    %c0_i32_0 = arith.constant 0 : i32
    return %c0_i32 : i32
  }
  func.func @transform_9(%arg0: i32) -> (i32, i32, i32) {
    %c0_i32 = arith.constant 0 : i32
    %c0_i32_0 = arith.constant 0 : i32
    %c0_i32_1 = arith.constant 0 : i32
    return %arg0, %c0_i32, %c0_i32_0 : i32, i32, i32
  }
}

</mosaic_0001>

<llo_original>
// kernel: csam_block432.1
$region0: #{csam_block432.1}
  #allocation0 [shape = 'u32[]', space=smem, size = 0x4, offset = 0x4, fixed_abs, tag = 'smem constant byte address 0x4 - core index']
  #allocation1 [shape = 'u32[144,128]{1,0:T(1,128)}', space=vmem, size = 0x12000, scoped, tag = 'internal scratch']
  #allocation2 [shape = 'f32[1]{0:T(128)S(6)}', space=smem, size = 0x200, scoped, tag = 'scoped memory for csam_block432.1']
  %s0 = inlined_call_operand.vmem [shape: f32[2,32,256], index: 0, kind: input, shape index: {}]
  %s1 = inlined_call_operand.vmem [shape: bf16[2,64,64], index: 1, kind: input, shape index: {}]
  %s2 = inlined_call_operand.vmem [shape: f32[32,2], index: 2, kind: input, shape index: {}]
  %s3 = inlined_call_operand.vmem [shape: f32[32,2], index: 3, kind: input, shape index: {}]
  %s4 = inlined_call_operand.vmem [shape: bf16[32,64], index: 4, kind: input, shape index: {}]
  %s5 = inlined_call_operand.vmem [shape: f32[32,1], index: 5, kind: input, shape index: {}]
  %s6 = inlined_call_operand.vmem [shape: bf16[512,256], index: 6, kind: input, shape index: {}]
  %s7 = inlined_call_operand.vmem [shape: bf16[64,256], index: 7, kind: input, shape index: {}]
  %s8 = inlined_call_operand.<no memory space> [shape: f32[1], index: 8, kind: input, shape index: {}]
  %s9 = inlined_call_operand.vmem [shape: f32[2,32,256], index: 9, kind: output, shape index: {}]
  %s10 = sld [smem:[#allocation0]]
  $region69: #{csam_block432.1} parent=0
    _
  %s12 = ssub.s32 1, %s10
  %s13 = scalar_select 0, %s12, %s10
  %14 = sst [smem:[#allocation2]] %s8
  loop: start=0, step=1, limit=4
  $region2: #{csam_block432.1} parent=0 // loop_pre_header
    _
  $region3: #{csam_block432.1} parent=0 // loop_header
    %s16 = sphi 0, %s20
    %p17 = scmp.ge.s32.totalorder %s16, 4
    %s26 = sphi 0, %s28
    %s29 = sphi 0, %s26
    %s30 = sphi 0, %s29
    %s46 = sphi 0, %s30
    %s52 = sphi 0, %s54
    %s55 = sphi 0, %s52
    %s56 = sphi 0, %s55
    %s72 = sphi 0, %s56
    %s76 = sphi 0, %s76
    %s78 = sphi 0, %s76
    %s79 = sphi 0, %s78
    %s93 = sphi 0, %s79
    %s97 = sphi 0, %s97
    %s99 = sphi 0, %s97
    %s100 = sphi 0, %s99
    %s114 = sphi 0, %s100
    %s118 = sphi 0, %s118
    %s120 = sphi 0, %s118
    %s121 = sphi 0, %s120
    %s135 = sphi 0, %s121
    %s139 = sphi 0, %s139
    %s141 = sphi 0, %s139
    %s142 = sphi 0, %s141
    %s156 = sphi 0, %s142
    %s160 = sphi 0, %s160
    %s162 = sphi 0, %s160
    %s163 = sphi 0, %s162
    %s177 = sphi 0, %s163
    %s181 = sphi 0, %s181
    %s183 = sphi 0, %s181
    %s184 = sphi 0, %s183
    %s198 = sphi 0, %s184
    %s202 = sphi 0, %s202
    %s204 = sphi 0, %s202
    %s205 = sphi 0, %s204
    %s219 = sphi 0, %s205
    %s225 = sphi 0, %s227
    %s228 = sphi 0, %s225
    %s229 = sphi 0, %s228
    %s245 = sphi 0, %s229
  $region4: #{csam_block432.1} parent=0 // loop_header_branch
    %19 = sbr.rel (%p17) target = $region8
  $region5: #{csam_block432.1} parent=0 // loop_body
    %s21 = ssub.s32 %s16, 1
    %s22 = ssub.s32 %s16, 2
    %s23 = sadd.s32 %s16, 1
    %s24 = ssub.s32 %s16, %s23
    %p25 = scmp.eq.s32.totalorder %s24, 0
    %s27 = sadd.s32 %s26, 1
    %s28 = scalar_select %p25, %s26, %s27
    %p31 = pneg %p25
    %p32 = scmp.eq.s32.totalorder %s16, 1
    %p33 = por %p31, %p32
    %p34 = scmp.ne.s32.totalorder %s26, %s29
    %p35 = scmp.eq.s32.totalorder %s16, 0
    %p36 = por %p34, %p35
    %p37 = scmp.ne.s32.totalorder %s26, %s29
    %p38 = scmp.eq.s32.totalorder %s21, 1
    %p39 = por %p37, %p38
    %p40 = scmp.ne.s32.totalorder %s29, %s30
    %p41 = scmp.eq.s32.totalorder %s21, 0
    %p42 = por %p40, %p41
    %p43 = scmp.ne.s32.totalorder %s29, %s30
    %p44 = scmp.eq.s32.totalorder %s22, 1
    %p45 = por %p43, %p44
    %p47 = scmp.ne.s32.totalorder %s30, %s46
    %p48 = scmp.eq.s32.totalorder %s22, 0
    %p49 = por %p47, %p48
    %s50 = ssub.s32 %s16, %s23
    %p51 = scmp.eq.s32.totalorder %s50, 0
    %s53 = sadd.s32 %s52, 1
    %s54 = scalar_select %p51, %s52, %s53
    %p57 = pneg %p51
    %p58 = scmp.eq.s32.totalorder %s16, 1
    %p59 = por %p57, %p58
    %p60 = scmp.ne.s32.totalorder %s52, %s55
    %p61 = scmp.eq.s32.totalorder %s16, 0
    %p62 = por %p60, %p61
    %p63 = scmp.ne.s32.totalorder %s52, %s55
    %p64 = scmp.eq.s32.totalorder %s21, 1
    %p65 = por %p63, %p64
    %p66 = scmp.ne.s32.totalorder %s55, %s56
    %p67 = scmp.eq.s32.totalorder %s21, 0
    %p68 = por %p66, %p67
    %p69 = scmp.ne.s32.totalorder %s55, %s56
    %p70 = scmp.eq.s32.totalorder %s22, 1
    %p71 = por %p69, %p70
    %p73 = scmp.ne.s32.totalorder %s56, %s72
    %p74 = scmp.eq.s32.totalorder %s22, 0
    %p75 = por %p73, %p74
    %s77 = sadd.s32 %s76, 1
    %p80 = scmp.eq.s32.totalorder %s16, 1
    %p81 = scmp.ne.s32.totalorder %s76, %s78
    %p82 = scmp.eq.s32.totalorder %s16, 0
    %p83 = por %p81, %p82
    %p84 = scmp.ne.s32.totalorder %s76, %s78
    %p85 = scmp.eq.s32.totalorder %s21, 1
    %p86 = por %p84, %p85
    %p87 = scmp.ne.s32.totalorder %s78, %s79
    %p88 = scmp.eq.s32.totalorder %s21, 0
    %p89 = por %p87, %p88
    %p90 = scmp.ne.s32.totalorder %s78, %s79
    %p91 = scmp.eq.s32.totalorder %s22, 1
    %p92 = por %p90, %p91
    %p94 = scmp.ne.s32.totalorder %s79, %s93
    %p95 = scmp.eq.s32.totalorder %s22, 0
    %p96 = por %p94, %p95
    %s98 = sadd.s32 %s97, 1
    %p101 = scmp.eq.s32.totalorder %s16, 1
    %p102 = scmp.ne.s32.totalorder %s97, %s99
    %p103 = scmp.eq.s32.totalorder %s16, 0
    %p104 = por %p102, %p103
    %p105 = scmp.ne.s32.totalorder %s97, %s99
    %p106 = scmp.eq.s32.totalorder %s21, 1
    %p107 = por %p105, %p106
    %p108 = scmp.ne.s32.totalorder %s99, %s100
    %p109 = scmp.eq.s32.totalorder %s21, 0
    %p110 = por %p108, %p109
    %p111 = scmp.ne.s32.totalorder %s99, %s100
    %p112 = scmp.eq.s32.totalorder %s22, 1
    %p113 = por %p111, %p112
    %p115 = scmp.ne.s32.totalorder %s100, %s114
    %p116 = scmp.eq.s32.totalorder %s22, 0
    %p117 = por %p115, %p116
    %s119 = sadd.s32 %s118, 1
    %p122 = scmp.eq.s32.totalorder %s16, 1
    %p123 = scmp.ne.s32.totalorder %s118, %s120
    %p124 = scmp.eq.s32.totalorder %s16, 0
    %p125 = por %p123, %p124
    %p126 = scmp.ne.s32.totalorder %s118, %s120
    %p127 = scmp.eq.s32.totalorder %s21, 1
    %p128 = por %p126, %p127
    %p129 = scmp.ne.s32.totalorder %s120, %s121
    %p130 = scmp.eq.s32.totalorder %s21, 0
    %p131 = por %p129, %p130
    %p132 = scmp.ne.s32.totalorder %s120, %s121
    %p133 = scmp.eq.s32.totalorder %s22, 1
    %p134 = por %p132, %p133
    %p136 = scmp.ne.s32.totalorder %s121, %s135
    %p137 = scmp.eq.s32.totalorder %s22, 0
    %p138 = por %p136, %p137
    %s140 = sadd.s32 %s139, 1
    %p143 = scmp.eq.s32.totalorder %s16, 1
    %p144 = scmp.ne.s32.totalorder %s139, %s141
    %p145 = scmp.eq.s32.totalorder %s16, 0
    %p146 = por %p144, %p145
    %p147 = scmp.ne.s32.totalorder %s139, %s141
    %p148 = scmp.eq.s32.totalorder %s21, 1
    %p149 = por %p147, %p148
    %p150 = scmp.ne.s32.totalorder %s141, %s142
    %p151 = scmp.eq.s32.totalorder %s21, 0
    %p152 = por %p150, %p151
    %p153 = scmp.ne.s32.totalorder %s141, %s142
    %p154 = scmp.eq.s32.totalorder %s22, 1
    %p155 = por %p153, %p154
    %p157 = scmp.ne.s32.totalorder %s142, %s156
    %p158 = scmp.eq.s32.totalorder %s22, 0
    %p159 = por %p157, %p158
    %s161 = sadd.s32 %s160, 1
    %p164 = scmp.eq.s32.totalorder %s16, 1
    %p165 = scmp.ne.s32.totalorder %s160, %s162
    %p166 = scmp.eq.s32.totalorder %s16, 0
    %p167 = por %p165, %p166
    %p168 = scmp.ne.s32.totalorder %s160, %s162
    %p169 = scmp.eq.s32.totalorder %s21, 1
    %p170 = por %p168, %p169
    %p171 = scmp.ne.s32.totalorder %s162, %s163
    %p172 = scmp.eq.s32.totalorder %s21, 0
    %p173 = por %p171, %p172
    %p174 = scmp.ne.s32.totalorder %s162, %s163
    %p175 = scmp.eq.s32.totalorder %s22, 1
    %p176 = por %p174, %p175
    %p178 = scmp.ne.s32.totalorder %s163, %s177
    %p179 = scmp.eq.s32.totalorder %s22, 0
    %p180 = por %p178, %p179
    %s182 = sadd.s32 %s181, 1
    %p185 = scmp.eq.s32.totalorder %s16, 1
    %p186 = scmp.ne.s32.totalorder %s181, %s183
    %p187 = scmp.eq.s32.totalorder %s16, 0
    %p188 = por %p186, %p187
    %p189 = scmp.ne.s32.totalorder %s181, %s183
    %p190 = scmp.eq.s32.totalorder %s21, 1
    %p191 = por %p189, %p190
    %p192 = scmp.ne.s32.totalorder %s183, %s184
    %p193 = scmp.eq.s32.totalorder %s21, 0
    %p194 = por %p192, %p193
    %p195 = scmp.ne.s32.totalorder %s183, %s184
    %p196 = scmp.eq.s32.totalorder %s22, 1
    %p197 = por %p195, %p196
    %p199 = scmp.ne.s32.totalorder %s184, %s198
    %p200 = scmp.eq.s32.totalorder %s22, 0
    %p201 = por %p199, %p200
    %s203 = sadd.s32 %s202, 1
    %p206 = scmp.eq.s32.totalorder %s16, 1
    %p207 = scmp.ne.s32.totalorder %s202, %s204
    %p208 = scmp.eq.s32.totalorder %s16, 0
    %p209 = por %p207, %p208
    %p210 = scmp.ne.s32.totalorder %s202, %s204
    %p211 = scmp.eq.s32.totalorder %s21, 1
    %p212 = por %p210, %p211
    %p213 = scmp.ne.s32.totalorder %s204, %s205
    %p214 = scmp.eq.s32.totalorder %s21, 0
    %p215 = por %p213, %p214
    %p216 = scmp.ne.s32.totalorder %s204, %s205
    %p217 = scmp.eq.s32.totalorder %s22, 1
    %p218 = por %p216, %p217
    %p220 = scmp.ne.s32.totalorder %s205, %s219
    %p221 = scmp.eq.s32.totalorder %s22, 0
    %p222 = por %p220, %p221
    %s223 = ssub.s32 %s16, %s23
    %p224 = scmp.eq.s32.totalorder %s223, 0
    %s226 = sadd.s32 %s225, 1
    %s227 = scalar_select %p224, %s225, %s226
    %p230 = pneg %p224
    %p231 = scmp.eq.s32.totalorder %s16, 1
    %p232 = por %p230, %p231
    %p233 = scmp.ne.s32.totalorder %s225, %s228
    %p234 = scmp.eq.s32.totalorder %s16, 0
    %p235 = por %p233, %p234
    %p236 = scmp.ne.s32.totalorder %s225, %s228
    %p237 = scmp.eq.s32.totalorder %s21, 1
    %p238 = por %p236, %p237
    %p239 = scmp.ne.s32.totalorder %s228, %s229
    %p240 = scmp.eq.s32.totalorder %s21, 0
    %p241 = por %p239, %p240
    %p242 = scmp.ne.s32.totalorder %s228, %s229
    %p243 = scmp.eq.s32.totalorder %s22, 1
    %p244 = por %p242, %p243
    %p246 = scmp.ne.s32.totalorder %s229, %s245
    %p247 = scmp.eq.s32.totalorder %s22, 0
    %p248 = por %p246, %p247
    %p249 = scmp.le.s32.totalorder 1, %s16
    %p250 = scmp.lt.s32.totalorder %s16, 3
    %p251 = pnand %p249, %p250
    %p252 = pneg %p251
    // Predicated region
    $region9: #{csam_block432.1} parent=5 // pred_check
      _
    $region10: #{csam_block432.1} parent=5 // pred_check_branch
      %254 = sbr.rel (%p251) target = $region12
    $region11: #{csam_block432.1} parent=5 // pred_region
      %s255 = ssub.s32 %s16, 1
      // Predicated region
      $region13: #{csam_block432.1} parent=11 // pred_check
        %p256 = pneg %p89
      $region14: #{csam_block432.1} parent=11 // pred_check_branch
        %258 = sbr.rel (%p256) target = $region16
      $region15: #{csam_block432.1} parent=11 // pred_region
        _
      $region16: #{csam_block432.1} parent=11 // pred_fallthru
        _
      // Predicated region
      $region17: #{csam_block432.1} parent=11 // pred_check
        %p259 = pneg %p110
      $region18: #{csam_block432.1} parent=11 // pred_check_branch
        %261 = sbr.rel (%p259) target = $region20
      $region19: #{csam_block432.1} parent=11 // pred_region
        _
      $region20: #{csam_block432.1} parent=11 // pred_fallthru
        _
      // Predicated region
      $region21: #{csam_block432.1} parent=11 // pred_check
        %p262 = pneg %p131
      $region22: #{csam_block432.1} parent=11 // pred_check_branch
        %264 = sbr.rel (%p262) target = $region24
      $region23: #{csam_block432.1} parent=11 // pred_region
        _
      $region24: #{csam_block432.1} parent=11 // pred_fallthru
        _
      // Predicated region
      $region25: #{csam_block432.1} parent=11 // pred_check
        %p265 = pneg %p152
      $region26: #{csam_block432.1} parent=11 // pred_check_branch
        %267 = sbr.rel (%p265) target = $region28
      $region27: #{csam_block432.1} parent=11 // pred_region
        _
      $region28: #{csam_block432.1} parent=11 // pred_fallthru
        _
      // Predicated region
      $region29: #{csam_block432.1} parent=11 // pred_check
        %p268 = pneg %p173
      $region30: #{csam_block432.1} parent=11 // pred_check_branch
        %270 = sbr.rel (%p268) target = $region32
      $region31: #{csam_block432.1} parent=11 // pred_region
        _
      $region32: #{csam_block432.1} parent=11 // pred_fallthru
        _
      // Predicated region
      $region33: #{csam_block432.1} parent=11 // pred_check
        %p271 = pneg %p194
      $region34: #{csam_block432.1} parent=11 // pred_check_branch
        %273 = sbr.rel (%p271) target = $region36
      $region35: #{csam_block432.1} parent=11 // pred_region
        _
      $region36: #{csam_block432.1} parent=11 // pred_fallthru
        _
      // Predicated region
      $region37: #{csam_block432.1} parent=11 // pred_check
        %p274 = pneg %p215
      $region38: #{csam_block432.1} parent=11 // pred_check_branch
        %276 = sbr.rel (%p274) target = $region40
      $region39: #{csam_block432.1} parent=11 // pred_region
        _
      $region40: #{csam_block432.1} parent=11 // pred_fallthru
        _
    $region12: #{csam_block432.1} parent=5 // pred_fallthru
      _
    %p277 = scmp.lt.s32.totalorder %s16, 2
    // Predicated region
    $region41: #{csam_block432.1} parent=5 // pred_check
      %p278 = pneg %p277
    $region42: #{csam_block432.1} parent=5 // pred_check_branch
      %280 = sbr.rel (%p278) target = $region44
    $region43: #{csam_block432.1} parent=5 // pred_region
      // Predicated region
      $region45: #{csam_block432.1} parent=43 // pred_check
        %p281 = pneg %p36
      $region46: #{csam_block432.1} parent=43 // pred_check_branch
        %283 = sbr.rel (%p281) target = $region48
      $region47: #{csam_block432.1} parent=43 // pred_region
        %p284 = scmp.lt.s32.totalorder %s16, 1
        %s285 = scalar_select %p284, %s16, 1
        %s286 = smul.addr %s285, 8
        %s287 = smul.addr %s286, 8
        %s288 = scalar_lea.vmem %s0, %s287
      $region48: #{csam_block432.1} parent=43 // pred_fallthru
        _
      // Predicated region
      $region49: #{csam_block432.1} parent=43 // pred_check
        %p289 = pneg %p62
      $region50: #{csam_block432.1} parent=43 // pred_check_branch
        %291 = sbr.rel (%p289) target = $region52
      $region51: #{csam_block432.1} parent=43 // pred_region
        %p292 = scmp.lt.s32.totalorder %s16, 1
        %s293 = scalar_select %p292, %s16, 1
        %s294 = smul.addr %s293, 8
        %s295 = smul.addr %s294, 4
        %s296 = scalar_lea.vmem %s1, %s295
      $region52: #{csam_block432.1} parent=43 // pred_fallthru
        _
    $region44: #{csam_block432.1} parent=5 // pred_fallthru
      _
    %p297 = scmp.le.s32.totalorder 1, %s16
    %p298 = scmp.lt.s32.totalorder %s16, 3
    %p299 = pnand %p297, %p298
    %p300 = pneg %p299
    // Predicated region
    $region53: #{csam_block432.1} parent=5 // pred_check
      _
    $region54: #{csam_block432.1} parent=5 // pred_check_branch
      %302 = sbr.rel (%p299) target = $region56
    $region55: #{csam_block432.1} parent=5 // pred_region
      %s303 = ssub.s32 %s16, 1
      %p304 = scmp.lt.s32.totalorder %s21, 1
      %s305 = scalar_select %p304, %s21, 1
      %s306 = smul.addr %s305, 8
      %s307 = smul.addr %s306, 8
      %s308 = scalar_lea.vmem %s0, %s307
      %p309 = pneg %p42
      %p310 = pneg %p39
      %p311 = scmp.lt.s32.totalorder %s21, 1
      %s312 = scalar_select %p311, %s21, 1
      %s313 = smul.addr %s312, 8
      %s314 = smul.addr %s313, 4
      %s315 = scalar_lea.vmem %s1, %s314
      %p316 = pneg %p68
      %p317 = pneg %p65
      %p318 = pneg %p89
      %p319 = pneg %p86
      %p320 = pneg %p110
      %p321 = pneg %p107
      %p322 = pneg %p131
      %p323 = pneg %p128
      %p324 = pneg %p152
      %p325 = pneg %p149
      %p326 = pneg %p173
      %p327 = pneg %p170
      %p328 = pneg %p194
      %p329 = pneg %p191
      %p330 = pneg %p215
      %p331 = pneg %p212
      %p332 = pneg %p241
      %p333 = pneg %p238
      %p334 = scmp.lt.s32.totalorder %s21, 1
      %s335 = scalar_select %p334, %s21, 1
      %s336 = smul.addr %s335, 8
      %s337 = smul.addr %s336, 8
      %s338 = scalar_lea.vmem %s9, %s337
      %p339 = scmp.lt.s32.totalorder %s21, 1
      %s340 = scalar_select %p339, %s21, 1
      %s341 = smul.addr %s340, 8
      %s342 = smul.addr %s341, 8
      %s343 = scalar_lea.vmem %s0, %s342
      %p344 = scmp.lt.s32.totalorder %s21, 1
      %s345 = scalar_select %p344, %s21, 1
      %s346 = smul.addr %s345, 8
      %s347 = smul.addr %s346, 4
      %s348 = scalar_lea.vmem %s1, %s347
      %p349 = scmp.lt.s32.totalorder %s21, 1
      %s350 = scalar_select %p349, %s21, 1
      %s351 = smul.addr %s350, 8
      %s352 = smul.addr %s351, 8
      %s353 = scalar_lea.vmem %s9, %s352
      %v355 = vld [vmem:[%s343] sm:$0xff]
      %v356 = vld [vmem:[%s343 + $0x8] sm:$0xff]
      %v357 = vld [vmem:[%s343 + $0x10] sm:$0xff]
      %v358 = vld [vmem:[%s343 + $0x18] sm:$0xff]
      %v359 = vld [vmem:[%s343 + $0x20] sm:$0xff]
      %v360 = vld [vmem:[%s343 + $0x28] sm:$0xff]
      %v361 = vld [vmem:[%s343 + $0x30] sm:$0xff]
      %v362 = vld [vmem:[%s343 + $0x38] sm:$0xff]
      %v363 = vmax.f32 %v355, %v356
      %364 = vmax.xlane.f32.xlu0 %v363
      %v365 = vpop.xlane.xlu0 %364
      %v366 = vmax.f32 %v357, %v358
      %367 = vmax.xlane.f32.xlu0 %v366
      %v368 = vpop.xlane.xlu0 %367
      %v369 = vmax.f32 %v359, %v360
      %370 = vmax.xlane.f32.xlu0 %v369
      %v371 = vpop.xlane.xlu0 %370
      %v372 = vmax.f32 %v361, %v362
      %373 = vmax.xlane.f32.xlu0 %v372
      %v374 = vpop.xlane.xlu0 %373
      %v375 = vadd.f32 %v355, %v356
      %376 = vadd.xlane.f32.xlu0 %v375
      %v377 = vpop.xlane.xlu0 %376
      %v378 = vadd.f32 %v357, %v358
      %379 = vadd.xlane.f32.xlu0 %v378
      %v380 = vpop.xlane.xlu0 %379
      %v381 = vadd.f32 %v359, %v360
      %382 = vadd.xlane.f32.xlu0 %v381
      %v383 = vpop.xlane.xlu0 %382
      %v384 = vadd.f32 %v361, %v362
      %385 = vadd.xlane.f32.xlu0 %v384
      %v386 = vpop.xlane.xlu0 %385
      %v387 = vmul.f32 %v377, 0.00390625
      %v388 = vmul.f32 %v380, 0.00390625
      %v389 = vmul.f32 %v383, 0.00390625
      %v390 = vmul.f32 %v386, 0.00390625
      %v391 = vld [vmem:[%s2] sm:$0xff]
      %v392 = vld [vmem:[%s2 + $0x8] sm:$0xff]
      %v393 = vld [vmem:[%s2 + $0x10] sm:$0xff]
      %v394 = vld [vmem:[%s2 + $0x18] sm:$0xff]
      %v395 = vld [vmem:[%s3] sm:$0xff]
      %v396 = vld [vmem:[%s3 + $0x8] sm:$0xff]
      %v397 = vld [vmem:[%s3 + $0x10] sm:$0xff]
      %v398 = vld [vmem:[%s3 + $0x18] sm:$0xff]
      %v399 = vmul.f32 %v391, %v365
      %v400 = vmul.f32 %v392, %v368
      %v401 = vmul.f32 %v393, %v371
      %v402 = vmul.f32 %v394, %v374
      %vm403 = vcmask 15360
      %v404 = vsel %vm403, %v399, 0.0
      %v405 = vsel %vm403, %v400, 0.0
      %v406 = vadd.f32 %v404, %v405
      %v407 = vsel %vm403, %v401, 0.0
      %v408 = vadd.f32 %v406, %v407
      %v409 = vsel %vm403, %v402, 0.0
      %v410 = vadd.f32 %v408, %v409
      %v411 = vrot.slane %v410, 4
      %v412 = vadd.f32 %v410, %v411
      %v413 = vrot.slane %v412, 2
      %v414 = vadd.f32 %v412, %v413
      %v415 = vrot.slane %v414, 1
      %v416 = vadd.f32 %v414, %v415
      %v417 = vmax.f32 %v416, 0.0
      %v418 = vmul.f32 %v391, %v387
      %v419 = vmul.f32 %v392, %v388
      %v420 = vmul.f32 %v393, %v389
      %v421 = vmul.f32 %v394, %v390
      %v422 = vsel %vm403, %v418, 0.0
      %v423 = vsel %vm403, %v419, 0.0
      %v424 = vadd.f32 %v422, %v423
      %v425 = vsel %vm403, %v420, 0.0
      %v426 = vadd.f32 %v424, %v425
      %v427 = vsel %vm403, %v421, 0.0
      %v428 = vadd.f32 %v426, %v427
      %v429 = vrot.slane %v428, 4
      %v430 = vadd.f32 %v428, %v429
      %v431 = vrot.slane %v430, 2
      %v432 = vadd.f32 %v430, %v431
      %v433 = vrot.slane %v432, 1
      %v434 = vadd.f32 %v432, %v433
      %v435 = vmax.f32 %v434, 0.0
      %v436 = vmul.f32 %v395, %v417
      %v437 = vmul.f32 %v396, %v417
      %v438 = vmul.f32 %v397, %v417
      %v439 = vmul.f32 %v398, %v417
      %v440 = vsel %vm403, %v436, 0.0
      %441 = vadd.xlane.f32.xlu0 %v440
      %v442 = vpop.xlane.xlu0 %441
      %v443 = vsel %vm403, %v437, 0.0
      %444 = vadd.xlane.f32.xlu0 %v443
      %v445 = vpop.xlane.xlu0 %444
      %v446 = vsel %vm403, %v438, 0.0
      %447 = vadd.xlane.f32.xlu0 %v446
      %v448 = vpop.xlane.xlu0 %447
      %v449 = vsel %vm403, %v439, 0.0
      %450 = vadd.xlane.f32.xlu0 %v449
      %v451 = vpop.xlane.xlu0 %450
      %v452 = vmul.f32 %v395, %v435
      %v453 = vmul.f32 %v396, %v435
      %v454 = vmul.f32 %v397, %v435
      %v455 = vmul.f32 %v398, %v435
      %v456 = vsel %vm403, %v452, 0.0
      %457 = vadd.xlane.f32.xlu0 %v456
      %v458 = vpop.xlane.xlu0 %457
      %v459 = vsel %vm403, %v453, 0.0
      %460 = vadd.xlane.f32.xlu0 %v459
      %v461 = vpop.xlane.xlu0 %460
      %v462 = vsel %vm403, %v454, 0.0
      %463 = vadd.xlane.f32.xlu0 %v462
      %v464 = vpop.xlane.xlu0 %463
      %v465 = vsel %vm403, %v455, 0.0
      %466 = vadd.xlane.f32.xlu0 %v465
      %v467 = vpop.xlane.xlu0 %466
      %v468 = vadd.f32 %v442, %v458
      %v469 = vadd.f32 %v445, %v461
      %v470 = vadd.f32 %v448, %v464
      %v471 = vadd.f32 %v451, %v467
      %v472 = vxor.u32 %v468, 2147483648
      %v473 = vxor.u32 %v469, 2147483648
      %v474 = vxor.u32 %v470, 2147483648
      %v475 = vxor.u32 %v471, 2147483648
      %v476 = vmul.f32 %v472, 1.442695
      %v477 = vpow.pop %v476
      %v478 = vmul.f32 %v473, 1.442695
      %v479 = vpow.pop %v478
      %v480 = vmul.f32 %v474, 1.442695
      %v481 = vpow.pop %v480
      %v482 = vmul.f32 %v475, 1.442695
      %v483 = vpow.pop %v482
      %v484 = vadd.f32 %v477, 1.0
      %v485 = vadd.f32 %v479, 1.0
      %v486 = vadd.f32 %v481, 1.0
      %v487 = vadd.f32 %v483, 1.0
      %v488 = vrcp.pop %v484
      %v489 = vmul.f32 1.0, %v488
      %v490 = vrcp.pop %v485
      %v491 = vmul.f32 1.0, %v490
      %v492 = vrcp.pop %v486
      %v493 = vmul.f32 1.0, %v492
      %v494 = vrcp.pop %v487
      %v495 = vmul.f32 1.0, %v494
      %v496 = vmul.f32 %v355, %v489
      %v497 = vmul.f32 %v356, %v489
      %v498 = vmul.f32 %v357, %v491
      %v499 = vmul.f32 %v358, %v491
      %v500 = vmul.f32 %v359, %v493
      %v501 = vmul.f32 %v360, %v493
      %v502 = vmul.f32 %v361, %v495
      %v503 = vmul.f32 %v362, %v495
      %v504 = vmax.f32 %v496, %v500
      %v505 = vmax.f32 %v498, %v502
      %v506 = vmax.f32 %v504, %v505
      %v507 = vrot.slane %v506, 4
      %v508 = vmax.f32 %v506, %v507
      %v509 = vrot.slane %v508, 2
      %v510 = vmax.f32 %v508, %v509
      %v511 = vrot.slane %v510, 1
      %v512 = vmax.f32 %v510, %v511
      %v513 = vmax.f32 %v497, %v501
      %v514 = vmax.f32 %v499, %v503
      %v515 = vmax.f32 %v513, %v514
      %v516 = vrot.slane %v515, 4
      %v517 = vmax.f32 %v515, %v516
      %v518 = vrot.slane %v517, 2
      %v519 = vmax.f32 %v517, %v518
      %v520 = vrot.slane %v519, 1
      %v521 = vmax.f32 %v519, %v520
      %v522 = vadd.f32 %v496, %v498
      %v523 = vadd.f32 %v522, %v500
      %v524 = vadd.f32 %v523, %v502
      %v525 = vrot.slane %v524, 4
      %v526 = vadd.f32 %v524, %v525
      %v527 = vrot.slane %v526, 2
      %v528 = vadd.f32 %v526, %v527
      %v529 = vrot.slane %v528, 1
      %v530 = vadd.f32 %v528, %v529
      %v531 = vadd.f32 %v497, %v499
      %v532 = vadd.f32 %v531, %v501
      %v533 = vadd.f32 %v532, %v503
      %v534 = vrot.slane %v533, 4
      %v535 = vadd.f32 %v533, %v534
      %v536 = vrot.slane %v535, 2
      %v537 = vadd.f32 %v535, %v536
      %v538 = vrot.slane %v537, 1
      %v539 = vadd.f32 %v537, %v538
      %v540 = vmul.f32 %v530, 0.03125
      %v541 = vmul.f32 %v539, 0.03125
      %v542 = vpack.c.bf16 %v512, %v512
      %v543 = vpack.c.bf16 %v521, %v521
      %v544 = vpack.c.bf16 %v540, %v540
      %v545 = vpack.c.bf16 %v541, %v541
      %v546 = vld [vmem:[%s6] sm:$0xff]
      %v547 = vld [vmem:[%s6 + $0x8] sm:$0xff]
      %v548 = vld [vmem:[%s6 + $0x10] sm:$0xff]
      %v549 = vld [vmem:[%s6 + $0x18] sm:$0xff]
      %v550 = vld [vmem:[%s6 + $0x20] sm:$0xff]
      %v551 = vld [vmem:[%s6 + $0x28] sm:$0xff]
      %v552 = vld [vmem:[%s6 + $0x30] sm:$0xff]
      %v553 = vld [vmem:[%s6 + $0x38] sm:$0xff]
      %v554 = vld [vmem:[%s6 + $0x40] sm:$0xff]
      %v555 = vld [vmem:[%s6 + $0x48] sm:$0xff]
      %v556 = vld [vmem:[%s6 + $0x50] sm:$0xff]
      %v557 = vld [vmem:[%s6 + $0x58] sm:$0xff]
      %v558 = vld [vmem:[%s6 + $0x60] sm:$0xff]
      %v559 = vld [vmem:[%s6 + $0x68] sm:$0xff]
      %v560 = vld [vmem:[%s6 + $0x70] sm:$0xff]
      %v561 = vld [vmem:[%s6 + $0x78] sm:$0xff]
      %v562 = vld [vmem:[%s6 + $0x80] sm:$0xff]
      %v563 = vld [vmem:[%s6 + $0x88] sm:$0xff]
      %v564 = vld [vmem:[%s6 + $0x90] sm:$0xff]
      %v565 = vld [vmem:[%s6 + $0x98] sm:$0xff]
      %v566 = vld [vmem:[%s6 + $0xa0] sm:$0xff]
      %v567 = vld [vmem:[%s6 + $0xa8] sm:$0xff]
      %v568 = vld [vmem:[%s6 + $0xb0] sm:$0xff]
      %v569 = vld [vmem:[%s6 + $0xb8] sm:$0xff]
      %v570 = vld [vmem:[%s6 + $0xc0] sm:$0xff]
      %v571 = vld [vmem:[%s6 + $0xc8] sm:$0xff]
      %v572 = vld [vmem:[%s6 + $0xd0] sm:$0xff]
      %v573 = vld [vmem:[%s6 + $0xd8] sm:$0xff]
      %v574 = vld [vmem:[%s6 + $0xe0] sm:$0xff]
      %v575 = vld [vmem:[%s6 + $0xe8] sm:$0xff]
      %v576 = vld [vmem:[%s6 + $0xf0] sm:$0xff]
      %v577 = vld [vmem:[%s6 + $0xf8] sm:$0xff]
      %v578 = vld [vmem:[%s6 + $0x100] sm:$0xff]
      %v579 = vld [vmem:[%s6 + $0x108] sm:$0xff]
      %v580 = vld [vmem:[%s6 + $0x110] sm:$0xff]
      %v581 = vld [vmem:[%s6 + $0x118] sm:$0xff]
      %v582 = vld [vmem:[%s6 + $0x120] sm:$0xff]
      %v583 = vld [vmem:[%s6 + $0x128] sm:$0xff]
      %v584 = vld [vmem:[%s6 + $0x130] sm:$0xff]
      %v585 = vld [vmem:[%s6 + $0x138] sm:$0xff]
      %v586 = vld [vmem:[%s6 + $0x140] sm:$0xff]
      %v587 = vld [vmem:[%s6 + $0x148] sm:$0xff]
      %v588 = vld [vmem:[%s6 + $0x150] sm:$0xff]
      %v589 = vld [vmem:[%s6 + $0x158] sm:$0xff]
      %v590 = vld [vmem:[%s6 + $0x160] sm:$0xff]
      %v591 = vld [vmem:[%s6 + $0x168] sm:$0xff]
      %v592 = vld [vmem:[%s6 + $0x170] sm:$0xff]
      %v593 = vld [vmem:[%s6 + $0x178] sm:$0xff]
      %v594 = vld [vmem:[%s6 + $0x180] sm:$0xff]
      %v595 = vld [vmem:[%s6 + $0x188] sm:$0xff]
      %v596 = vld [vmem:[%s6 + $0x190] sm:$0xff]
      %v597 = vld [vmem:[%s6 + $0x198] sm:$0xff]
      %v598 = vld [vmem:[%s6 + $0x1a0] sm:$0xff]
      %v599 = vld [vmem:[%s6 + $0x1a8] sm:$0xff]
      %v600 = vld [vmem:[%s6 + $0x1b0] sm:$0xff]
      %v601 = vld [vmem:[%s6 + $0x1b8] sm:$0xff]
      %v602 = vld [vmem:[%s6 + $0x1c0] sm:$0xff]
      %v603 = vld [vmem:[%s6 + $0x1c8] sm:$0xff]
      %v604 = vld [vmem:[%s6 + $0x1d0] sm:$0xff]
      %v605 = vld [vmem:[%s6 + $0x1d8] sm:$0xff]
      %v606 = vld [vmem:[%s6 + $0x1e0] sm:$0xff]
      %v607 = vld [vmem:[%s6 + $0x1e8] sm:$0xff]
      %v608 = vld [vmem:[%s6 + $0x1f0] sm:$0xff]
      %v609 = vld [vmem:[%s6 + $0x1f8] sm:$0xff]
      %s610 = sld [smem:[#allocation2]]
      %v611 = vstv %s610
      %v676 = vunpack.c.l.b16 %v546
      %v677 = vunpack.c.h.b16 %v546
      %v678 = vunpack.c.l.b16 %v547
      %v679 = vunpack.c.h.b16 %v547
      %v680 = vunpack.c.l.b16 %v548
      %v681 = vunpack.c.h.b16 %v548
      %v682 = vunpack.c.l.b16 %v549
      %v683 = vunpack.c.h.b16 %v549
      %v684 = vunpack.c.l.b16 %v550
      %v685 = vunpack.c.h.b16 %v550
      %v686 = vunpack.c.l.b16 %v551
      %v687 = vunpack.c.h.b16 %v551
      %v688 = vunpack.c.l.b16 %v552
      %v689 = vunpack.c.h.b16 %v552
      %v690 = vunpack.c.l.b16 %v553
      %v691 = vunpack.c.h.b16 %v553
      %v692 = vunpack.c.l.b16 %v554
      %v693 = vunpack.c.h.b16 %v554
      %v694 = vunpack.c.l.b16 %v555
      %v695 = vunpack.c.h.b16 %v555
      %v696 = vunpack.c.l.b16 %v556
      %v697 = vunpack.c.h.b16 %v556
      %v698 = vunpack.c.l.b16 %v557
      %v699 = vunpack.c.h.b16 %v557
      %v700 = vunpack.c.l.b16 %v558
      %v701 = vunpack.c.h.b16 %v558
      %v702 = vunpack.c.l.b16 %v559
      %v703 = vunpack.c.h.b16 %v559
      %v704 = vunpack.c.l.b16 %v560
      %v705 = vunpack.c.h.b16 %v560
      %v706 = vunpack.c.l.b16 %v561
      %v707 = vunpack.c.h.b16 %v561
      %v708 = vunpack.c.l.b16 %v562
      %v709 = vunpack.c.h.b16 %v562
      %v710 = vunpack.c.l.b16 %v563
      %v711 = vunpack.c.h.b16 %v563
      %v712 = vunpack.c.l.b16 %v564
      %v713 = vunpack.c.h.b16 %v564
      %v714 = vunpack.c.l.b16 %v565
      %v715 = vunpack.c.h.b16 %v565
      %v716 = vunpack.c.l.b16 %v566
      %v717 = vunpack.c.h.b16 %v566
      %v718 = vunpack.c.l.b16 %v567
      %v719 = vunpack.c.h.b16 %v567
      %v720 = vunpack.c.l.b16 %v568
      %v721 = vunpack.c.h.b16 %v568
      %v722 = vunpack.c.l.b16 %v569
      %v723 = vunpack.c.h.b16 %v569
      %v724 = vunpack.c.l.b16 %v570
      %v725 = vunpack.c.h.b16 %v570
      %v726 = vunpack.c.l.b16 %v571
      %v727 = vunpack.c.h.b16 %v571
      %v728 = vunpack.c.l.b16 %v572
      %v729 = vunpack.c.h.b16 %v572
      %v730 = vunpack.c.l.b16 %v573
      %v731 = vunpack.c.h.b16 %v573
      %v732 = vunpack.c.l.b16 %v574
      %v733 = vunpack.c.h.b16 %v574
      %v734 = vunpack.c.l.b16 %v575
      %v735 = vunpack.c.h.b16 %v575
      %v736 = vunpack.c.l.b16 %v576
      %v737 = vunpack.c.h.b16 %v576
      %v738 = vunpack.c.l.b16 %v577
      %v739 = vunpack.c.h.b16 %v577
      %v740 = vunpack.c.l.b16 %v578
      %v741 = vunpack.c.h.b16 %v578
      %v742 = vunpack.c.l.b16 %v579
      %v743 = vunpack.c.h.b16 %v579
      %v744 = vunpack.c.l.b16 %v580
      %v745 = vunpack.c.h.b16 %v580
      %v746 = vunpack.c.l.b16 %v581
      %v747 = vunpack.c.h.b16 %v581
      %v748 = vunpack.c.l.b16 %v582
      %v749 = vunpack.c.h.b16 %v582
      %v750 = vunpack.c.l.b16 %v583
      %v751 = vunpack.c.h.b16 %v583
      %v752 = vunpack.c.l.b16 %v584
      %v753 = vunpack.c.h.b16 %v584
      %v754 = vunpack.c.l.b16 %v585
      %v755 = vunpack.c.h.b16 %v585
      %v756 = vunpack.c.l.b16 %v586
      %v757 = vunpack.c.h.b16 %v586
      %v758 = vunpack.c.l.b16 %v587
      %v759 = vunpack.c.h.b16 %v587
      %v760 = vunpack.c.l.b16 %v588
      %v761 = vunpack.c.h.b16 %v588
      %v762 = vunpack.c.l.b16 %v589
      %v763 = vunpack.c.h.b16 %v589
      %v764 = vunpack.c.l.b16 %v590
      %v765 = vunpack.c.h.b16 %v590
      %v766 = vunpack.c.l.b16 %v591
      %v767 = vunpack.c.h.b16 %v591
      %v768 = vunpack.c.l.b16 %v592
      %v769 = vunpack.c.h.b16 %v592
      %v770 = vunpack.c.l.b16 %v593
      %v771 = vunpack.c.h.b16 %v593
      %v772 = vunpack.c.l.b16 %v594
      %v773 = vunpack.c.h.b16 %v594
      %v774 = vunpack.c.l.b16 %v595
      %v775 = vunpack.c.h.b16 %v595
      %v776 = vunpack.c.l.b16 %v596
      %v777 = vunpack.c.h.b16 %v596
      %v778 = vunpack.c.l.b16 %v597
      %v779 = vunpack.c.h.b16 %v597
      %v780 = vunpack.c.l.b16 %v598
      %v781 = vunpack.c.h.b16 %v598
      %v782 = vunpack.c.l.b16 %v599
      %v783 = vunpack.c.h.b16 %v599
      %v784 = vunpack.c.l.b16 %v600
      %v785 = vunpack.c.h.b16 %v600
      %v786 = vunpack.c.l.b16 %v601
      %v787 = vunpack.c.h.b16 %v601
      %v788 = vunpack.c.l.b16 %v602
      %v789 = vunpack.c.h.b16 %v602
      %v790 = vunpack.c.l.b16 %v603
      %v791 = vunpack.c.h.b16 %v603
      %v792 = vunpack.c.l.b16 %v604
      %v793 = vunpack.c.h.b16 %v604
      %v794 = vunpack.c.l.b16 %v605
      %v795 = vunpack.c.h.b16 %v605
      %v796 = vunpack.c.l.b16 %v606
      %v797 = vunpack.c.h.b16 %v606
      %v798 = vunpack.c.l.b16 %v607
      %v799 = vunpack.c.h.b16 %v607
      %v800 = vunpack.c.l.b16 %v608
      %v801 = vunpack.c.h.b16 %v608
      %v802 = vunpack.c.l.b16 %v609
      %v803 = vunpack.c.h.b16 %v609
      %v804 = vpack.c.b16 %v678, %v676
      %v805 = vpack.c.b16 %v679, %v677
      %v806 = vpack.c.b16 %v682, %v680
      %v807 = vpack.c.b16 %v683, %v681
      %v808 = vpack.c.b16 %v686, %v684
      %v809 = vpack.c.b16 %v687, %v685
      %v810 = vpack.c.b16 %v690, %v688
      %v811 = vpack.c.b16 %v691, %v689
      %v812 = vpack.c.b16 %v694, %v692
      %v813 = vpack.c.b16 %v695, %v693
      %v814 = vpack.c.b16 %v698, %v696
      %v815 = vpack.c.b16 %v699, %v697
      %v816 = vpack.c.b16 %v702, %v700
      %v817 = vpack.c.b16 %v703, %v701
      %v818 = vpack.c.b16 %v706, %v704
      %v819 = vpack.c.b16 %v707, %v705
      %v820 = vpack.c.b16 %v710, %v708
      %v821 = vpack.c.b16 %v711, %v709
      %v822 = vpack.c.b16 %v714, %v712
      %v823 = vpack.c.b16 %v715, %v713
      %v824 = vpack.c.b16 %v718, %v716
      %v825 = vpack.c.b16 %v719, %v717
      %v826 = vpack.c.b16 %v722, %v720
      %v827 = vpack.c.b16 %v723, %v721
      %v828 = vpack.c.b16 %v726, %v724
      %v829 = vpack.c.b16 %v727, %v725
      %v830 = vpack.c.b16 %v730, %v728
      %v831 = vpack.c.b16 %v731, %v729
      %v832 = vpack.c.b16 %v734, %v732
      %v833 = vpack.c.b16 %v735, %v733
      %v834 = vpack.c.b16 %v738, %v736
      %v835 = vpack.c.b16 %v739, %v737
      %v836 = vpack.c.b16 %v742, %v740
      %v837 = vpack.c.b16 %v743, %v741
      %v838 = vpack.c.b16 %v746, %v744
      %v839 = vpack.c.b16 %v747, %v745
      %v840 = vpack.c.b16 %v750, %v748
      %v841 = vpack.c.b16 %v751, %v749
      %v842 = vpack.c.b16 %v754, %v752
      %v843 = vpack.c.b16 %v755, %v753
      %v844 = vpack.c.b16 %v758, %v756
      %v845 = vpack.c.b16 %v759, %v757
      %v846 = vpack.c.b16 %v762, %v760
      %v847 = vpack.c.b16 %v763, %v761
      %v848 = vpack.c.b16 %v766, %v764
      %v849 = vpack.c.b16 %v767, %v765
      %v850 = vpack.c.b16 %v770, %v768
      %v851 = vpack.c.b16 %v771, %v769
      %v852 = vpack.c.b16 %v774, %v772
      %v853 = vpack.c.b16 %v775, %v773
      %v854 = vpack.c.b16 %v778, %v776
      %v855 = vpack.c.b16 %v779, %v777
      %v856 = vpack.c.b16 %v782, %v780
      %v857 = vpack.c.b16 %v783, %v781
      %v858 = vpack.c.b16 %v786, %v784
      %v859 = vpack.c.b16 %v787, %v785
      %v860 = vpack.c.b16 %v790, %v788
      %v861 = vpack.c.b16 %v791, %v789
      %v862 = vpack.c.b16 %v794, %v792
      %v863 = vpack.c.b16 %v795, %v793
      %v864 = vpack.c.b16 %v798, %v796
      %v865 = vpack.c.b16 %v799, %v797
      %v866 = vpack.c.b16 %v802, %v800
      %v867 = vpack.c.b16 %v803, %v801
      %932 = vmatprep.subr.bf16.mxu0 %v819
      %933 = vmatpush1.bf16.msra.mxu0 %v818
      %934 = vmatprep.subr.bf16.mxu0 %v817
      %935 = vmatpush1.bf16.msra.mxu0 %v816
      %936 = vmatprep.subr.bf16.mxu0 %v815
      %937 = vmatpush1.bf16.msra.mxu0 %v814
      %938 = vmatprep.subr.bf16.mxu0 %v813
      %939 = vmatpush1.bf16.msra.mxu0 %v812
      %940 = vmatprep.subr.bf16.mxu0 %v811
      %941 = vmatpush1.bf16.msra.mxu0 %v810
      %942 = vmatprep.subr.bf16.mxu0 %v809
      %943 = vmatpush1.bf16.msra.mxu0 %v808
      %944 = vmatprep.subr.bf16.mxu0 %v807
      %945 = vmatpush1.bf16.msra.mxu0 %v806
      %946 = vmatprep.subr.bf16.mxu0 %v805
      %947 = vmatpush1.bf16.msra.mxu0 %v804
      %948 = vmatprep.subr.bf16.mxu0 %v835
      %949 = vmatpush2.bf16.msra.mxu0 %v834
      %950 = vmatprep.subr.bf16.mxu0 %v833
      %951 = vmatpush2.bf16.msra.mxu0 %v832
      %952 = vmatprep.subr.bf16.mxu0 %v831
      %953 = vmatpush2.bf16.msra.mxu0 %v830
      %954 = vmatprep.subr.bf16.mxu0 %v829
      %955 = vmatpush2.bf16.msra.mxu0 %v828
      %956 = vmatprep.subr.bf16.mxu0 %v827
      %957 = vmatpush2.bf16.msra.mxu0 %v826
      %958 = vmatprep.subr.bf16.mxu0 %v825
      %959 = vmatpush2.bf16.msra.mxu0 %v824
      %960 = vmatprep.subr.bf16.mxu0 %v823
      %961 = vmatpush2.bf16.msra.mxu0 %v822
      %962 = vmatprep.subr.bf16.mxu0 %v821
      %963 = vmatpush2.bf16.msra.mxu0 %v820
      %964 = vmatprep.mubr.bf16.mxu0 %v543
      %965 = vmatmul.mubr.bf16.gmra.mxu0 %v542
      %v966 = vpop.f32.mrf.mxu0
      %v967 = vadd.f32 %v611, %v966
      %v968 = vpop.f32.mrf.mxu0
      %v969 = vadd.f32 %v611, %v968
      %v970 = vpop.f32.mrf.mxu0
      %v971 = vpop.f32.mrf.mxu0
      %972 = vdwg.mxu0
      %973 = vmatprep.subr.bf16.mxu0 %v851
      %974 = vmatpush1.bf16.msra.mxu0 %v850
      %975 = vmatprep.subr.bf16.mxu0 %v849
      %976 = vmatpush1.bf16.msra.mxu0 %v848
      %977 = vmatprep.subr.bf16.mxu0 %v847
      %978 = vmatpush1.bf16.msra.mxu0 %v846
      %979 = vmatprep.subr.bf16.mxu0 %v845
      %980 = vmatpush1.bf16.msra.mxu0 %v844
      %981 = vmatprep.subr.bf16.mxu0 %v843
      %982 = vmatpush1.bf16.msra.mxu0 %v842
      %983 = vmatprep.subr.bf16.mxu0 %v841
      %984 = vmatpush1.bf16.msra.mxu0 %v840
      %985 = vmatprep.subr.bf16.mxu0 %v839
      %986 = vmatpush1.bf16.msra.mxu0 %v838
      %987 = vmatprep.subr.bf16.mxu0 %v837
      %988 = vmatpush1.bf16.msra.mxu0 %v836
      %989 = vmatprep.subr.bf16.mxu0 %v867
      %990 = vmatpush2.bf16.msra.mxu0 %v866
      %991 = vmatprep.subr.bf16.mxu0 %v865
      %992 = vmatpush2.bf16.msra.mxu0 %v864
      %993 = vmatprep.subr.bf16.mxu0 %v863
      %994 = vmatpush2.bf16.msra.mxu0 %v862
      %995 = vmatprep.subr.bf16.mxu0 %v861
      %996 = vmatpush2.bf16.msra.mxu0 %v860
      %997 = vmatprep.subr.bf16.mxu0 %v859
      %998 = vmatpush2.bf16.msra.mxu0 %v858
      %999 = vmatprep.subr.bf16.mxu0 %v857
      %1000 = vmatpush2.bf16.msra.mxu0 %v856
      %1001 = vmatprep.subr.bf16.mxu0 %v855
      %1002 = vmatpush2.bf16.msra.mxu0 %v854
      %1003 = vmatprep.subr.bf16.mxu0 %v853
      %1004 = vmatpush2.bf16.msra.mxu0 %v852
      %1005 = vmatprep.mubr.bf16.mxu0 %v545
      %1006 = vmatmul.mubr.bf16.gmra.mxu0 %v544
      %v1007 = vpop.f32.mrf.mxu0
      %v1008 = vadd.f32 %v967, %v1007
      %v1009 = vpop.f32.mrf.mxu0
      %v1010 = vadd.f32 %v969, %v1009
      %v1011 = vpop.f32.mrf.mxu0
      %v1012 = vpop.f32.mrf.mxu0
      %1013 = vdwg.mxu0
      %v1014 = vxor.u32 %v1008, 2147483648
      %v1015 = vxor.u32 %v1010, 2147483648
      %v1016 = vmul.f32 %v1014, 1.442695
      %v1017 = vpow.pop %v1016
      %v1018 = vmul.f32 %v1015, 1.442695
      %v1019 = vpow.pop %v1018
      %v1020 = vadd.f32 %v1017, 1.0
      %v1021 = vadd.f32 %v1019, 1.0
      %v1022 = vrcp.pop %v1020
      %v1023 = vmul.f32 1.0, %v1022
      %v1024 = vrcp.pop %v1021
      %v1025 = vmul.f32 1.0, %v1024
      %v1026 = vld [vmem:[%s4] sm:$0xf]
      %v1027 = vld [vmem:[%s4 + $0x4] sm:$0xf]
      %v1028 = vld [vmem:[%s4 + $0x8] sm:$0xf]
      %v1029 = vld [vmem:[%s4 + $0xc] sm:$0xf]
      %v1030 = vld [vmem:[%s348] sm:$0xf]
      %v1031 = vld [vmem:[%s348 + $0x4] sm:$0xf]
      %v1032 = vld [vmem:[%s348 + $0x8] sm:$0xf]
      %v1033 = vld [vmem:[%s348 + $0xc] sm:$0xf]
      %v1034 = vld [vmem:[%s348 + $0x10] sm:$0xf]
      %v1035 = vld [vmem:[%s348 + $0x14] sm:$0xf]
      %v1036 = vld [vmem:[%s348 + $0x18] sm:$0xf]
      %v1037 = vld [vmem:[%s348 + $0x1c] sm:$0xf]
      %v1038 = vld [vmem:[%s5] sm:$0xff]
      %v1039 = vld [vmem:[%s5 + $0x8] sm:$0xff]
      %v1040 = vld [vmem:[%s5 + $0x10] sm:$0xff]
      %v1041 = vld [vmem:[%s5 + $0x18] sm:$0xff]
      %1043 = vset.pattern.permute.xlu0 0
      %1044 = vperm.xlu0 %1043, %v1038
      %v1045 = vpop.permute.xlu0 %1044
      %1048 = vset.pattern.permute.xlu0 0
      %1049 = vperm.xlu0 %1048, %v1039
      %v1050 = vpop.permute.xlu0 %1049
      %1053 = vset.pattern.permute.xlu0 0
      %1054 = vperm.xlu0 %1053, %v1040
      %v1055 = vpop.permute.xlu0 %1054
      %1058 = vset.pattern.permute.xlu0 0
      %1059 = vperm.xlu0 %1058, %v1041
      %v1060 = vpop.permute.xlu0 %1059
      %v1066 = vunpack.c.l.b16 %v1026
      %v1067 = vunpack.c.l.b16 %v1027
      %v1068 = vunpack.c.l.b16 %v1028
      %v1069 = vunpack.c.l.b16 %v1029
      %v1070 = vpack.c.b16 %v1067, %v1066
      %v1071 = vpack.c.b16 %v1069, %v1068
      %v1080 = vunpack.c.l.b16 %v1030
      %v1081 = vunpack.c.l.b16 %v1031
      %v1082 = vunpack.c.l.b16 %v1032
      %v1083 = vunpack.c.l.b16 %v1033
      %v1084 = vunpack.c.l.b16 %v1034
      %v1085 = vunpack.c.l.b16 %v1035
      %v1086 = vunpack.c.l.b16 %v1036
      %v1087 = vunpack.c.l.b16 %v1037
      %v1088 = vpack.c.b16 %v1081, %v1080
      %v1089 = vpack.c.b16 %v1083, %v1082
      %v1090 = vpack.c.b16 %v1085, %v1084
      %v1091 = vpack.c.b16 %v1087, %v1086
      %vm1096 = vcmask 523264
      %v1098 = vsel %vm1096, %v1070, 0
      %v1101 = vsel %vm1096, %v1071, 0
      %1103 = vmatprep.subr.bf16.mxu0 0
      %1104 = vmatpush1.bf16.msra.mxu0 0
      %1105 = vmatprep.subr.bf16.mxu0 0
      %1106 = vmatpush1.bf16.msra.mxu0 0
      %1107 = vmatprep.subr.bf16.mxu0 0
      %1108 = vmatpush1.bf16.msra.mxu0 0
      %1109 = vmatprep.subr.bf16.mxu0 0
      %1110 = vmatpush1.bf16.msra.mxu0 0
      %1111 = vmatprep.subr.bf16.mxu0 0
      %1112 = vmatpush1.bf16.msra.mxu0 %v1091
      %1113 = vmatprep.subr.bf16.mxu0 0
      %1114 = vmatpush1.bf16.msra.mxu0 %v1090
      %1115 = vmatprep.subr.bf16.mxu0 0
      %1116 = vmatpush1.bf16.msra.mxu0 %v1089
      %1117 = vmatprep.subr.bf16.mxu0 0
      %1118 = vmatpush1.bf16.msra.mxu0 %v1088
      %1119 = vmatprep.subr.bf16.mxu0 0
      %1120 = vmatpush2.bf16.msra.mxu0 0
      %1121 = vmatprep.subr.bf16.mxu0 0
      %1122 = vmatpush2.bf16.msra.mxu0 0
      %1123 = vmatprep.subr.bf16.mxu0 0
      %1124 = vmatpush2.bf16.msra.mxu0 0
      %1125 = vmatprep.subr.bf16.mxu0 0
      %1126 = vmatpush2.bf16.msra.mxu0 0
      %1127 = vmatprep.subr.bf16.mxu0 0
      %1128 = vmatpush2.bf16.msra.mxu0 0
      %1129 = vmatprep.subr.bf16.mxu0 0
      %1130 = vmatpush2.bf16.msra.mxu0 0
      %1131 = vmatprep.subr.bf16.mxu0 0
      %1132 = vmatpush2.bf16.msra.mxu0 0
      %1133 = vmatprep.subr.bf16.mxu0 0
      %1134 = vmatpush2.bf16.msra.mxu0 0
      %1135 = vmatprep.mubr.bf16.mxu0 0
      %1136 = vmatmul.mubr.bf16.gmra.mxu0 %v1098
      %v1137 = vpop.f32.mrf.mxu0
      %v1138 = vadd.f32 %v1045, %v1137
      %v1139 = vpop.f32.mrf.mxu0
      %v1140 = vpop.f32.mrf.mxu0
      %v1141 = vadd.f32 %v1050, %v1140
      %v1142 = vpop.f32.mrf.mxu0
      %1143 = vmatprep.mubr.bf16.mxu0 0
      %1144 = vmatmul.mubr.bf16.gmra.mxu0 %v1101
      %v1145 = vpop.f32.mrf.mxu0
      %v1146 = vadd.f32 %v1055, %v1145
      %v1147 = vpop.f32.mrf.mxu0
      %v1148 = vpop.f32.mrf.mxu0
      %v1149 = vadd.f32 %v1060, %v1148
      %v1150 = vpop.f32.mrf.mxu0
      %1151 = vdwg.mxu0
      %v1152 = vpack.c.bf16 %v1141, %v1138
      %v1153 = vpack.c.bf16 %v1149, %v1146
      %v1154 = vld [vmem:[%s7] sm:$0xff]
      %v1155 = vld [vmem:[%s7 + $0x8] sm:$0xff]
      %v1156 = vld [vmem:[%s7 + $0x10] sm:$0xff]
      %v1157 = vld [vmem:[%s7 + $0x18] sm:$0xff]
      %v1158 = vld [vmem:[%s7 + $0x20] sm:$0xff]
      %v1159 = vld [vmem:[%s7 + $0x28] sm:$0xff]
      %v1160 = vld [vmem:[%s7 + $0x30] sm:$0xff]
      %v1161 = vld [vmem:[%s7 + $0x38] sm:$0xff]
      %v1170 = vunpack.c.l.b16 %v1154
      %v1171 = vunpack.c.h.b16 %v1154
      %v1172 = vunpack.c.l.b16 %v1155
      %v1173 = vunpack.c.h.b16 %v1155
      %v1174 = vunpack.c.l.b16 %v1156
      %v1175 = vunpack.c.h.b16 %v1156
      %v1176 = vunpack.c.l.b16 %v1157
      %v1177 = vunpack.c.h.b16 %v1157
      %v1178 = vunpack.c.l.b16 %v1158
      %v1179 = vunpack.c.h.b16 %v1158
      %v1180 = vunpack.c.l.b16 %v1159
      %v1181 = vunpack.c.h.b16 %v1159
      %v1182 = vunpack.c.l.b16 %v1160
      %v1183 = vunpack.c.h.b16 %v1160
      %v1184 = vunpack.c.l.b16 %v1161
      %v1185 = vunpack.c.h.b16 %v1161
      %v1186 = vpack.c.b16 %v1172, %v1170
      %v1187 = vpack.c.b16 %v1173, %v1171
      %v1188 = vpack.c.b16 %v1176, %v1174
      %v1189 = vpack.c.b16 %v1177, %v1175
      %v1190 = vpack.c.b16 %v1180, %v1178
      %v1191 = vpack.c.b16 %v1181, %v1179
      %v1192 = vpack.c.b16 %v1184, %v1182
      %v1193 = vpack.c.b16 %v1185, %v1183
      %v1203 = vsel %vm1096, %v1152, 0
      %v1206 = vsel %vm1096, %v1153, 0
      %1208 = vmatprep.subr.bf16.mxu0 0
      %1209 = vmatpush1.bf16.msra.mxu0 0
      %1210 = vmatprep.subr.bf16.mxu0 0
      %1211 = vmatpush1.bf16.msra.mxu0 0
      %1212 = vmatprep.subr.bf16.mxu0 0
      %1213 = vmatpush1.bf16.msra.mxu0 0
      %1214 = vmatprep.subr.bf16.mxu0 0
      %1215 = vmatpush1.bf16.msra.mxu0 0
      %1216 = vmatprep.subr.bf16.mxu0 %v1193
      %1217 = vmatpush1.bf16.msra.mxu0 %v1192
      %1218 = vmatprep.subr.bf16.mxu0 %v1191
      %1219 = vmatpush1.bf16.msra.mxu0 %v1190
      %1220 = vmatprep.subr.bf16.mxu0 %v1189
      %1221 = vmatpush1.bf16.msra.mxu0 %v1188
      %1222 = vmatprep.subr.bf16.mxu0 %v1187
      %1223 = vmatpush1.bf16.msra.mxu0 %v1186
      %1224 = vmatprep.subr.bf16.mxu0 0
      %1225 = vmatpush2.bf16.msra.mxu0 0
      %1226 = vmatprep.subr.bf16.mxu0 0
      %1227 = vmatpush2.bf16.msra.mxu0 0
      %1228 = vmatprep.subr.bf16.mxu0 0
      %1229 = vmatpush2.bf16.msra.mxu0 0
      %1230 = vmatprep.subr.bf16.mxu0 0
      %1231 = vmatpush2.bf16.msra.mxu0 0
      %1232 = vmatprep.subr.bf16.mxu0 0
      %1233 = vmatpush2.bf16.msra.mxu0 0
      %1234 = vmatprep.subr.bf16.mxu0 0
      %1235 = vmatpush2.bf16.msra.mxu0 0
      %1236 = vmatprep.subr.bf16.mxu0 0
      %1237 = vmatpush2.bf16.msra.mxu0 0
      %1238 = vmatprep.subr.bf16.mxu0 0
      %1239 = vmatpush2.bf16.msra.mxu0 0
      %1240 = vmatprep.mubr.bf16.mxu0 0
      %1241 = vmatmul.mubr.bf16.gmra.mxu0 %v1203
      %v1242 = vpop.f32.mrf.mxu0
      %v1243 = vadd.f32 0.0, %v1242
      %v1244 = vpop.f32.mrf.mxu0
      %v1245 = vadd.f32 0.0, %v1244
      %v1246 = vpop.f32.mrf.mxu0
      %v1247 = vadd.f32 0.0, %v1246
      %v1248 = vpop.f32.mrf.mxu0
      %v1249 = vadd.f32 0.0, %v1248
      %1250 = vmatprep.mubr.bf16.mxu0 0
      %1251 = vmatmul.mubr.bf16.gmra.mxu0 %v1206
      %v1252 = vpop.f32.mrf.mxu0
      %v1253 = vadd.f32 0.0, %v1252
      %v1254 = vpop.f32.mrf.mxu0
      %v1255 = vadd.f32 0.0, %v1254
      %v1256 = vpop.f32.mrf.mxu0
      %v1257 = vadd.f32 0.0, %v1256
      %v1258 = vpop.f32.mrf.mxu0
      %v1259 = vadd.f32 0.0, %v1258
      %1260 = vdwg.mxu0
      %v1261 = vlaneseq
      %v1262 = vshrl.u32 %v1261, 7
      %v1263 = vsub.s32 0, %v1262
      %v1264 = vrot.slane %v1023, %v1263
      %v1265 = vlaneseq
      %v1266 = vshrl.u32 %v1265, 7
      %v1267 = vsub.s32 0, %v1266
      %v1268 = vrot.slane %v1025, %v1267
      %v1269 = vmul.f32 %v496, %v1264
      %v1270 = vmul.f32 %v497, %v1268
      %v1271 = vmul.f32 %v498, %v1264
      %v1272 = vmul.f32 %v499, %v1268
      %v1273 = vmul.f32 %v500, %v1264
      %v1274 = vmul.f32 %v501, %v1268
      %v1275 = vmul.f32 %v502, %v1264
      %v1276 = vmul.f32 %v503, %v1268
      %v1277 = vadd.f32 %v1269, %v355
      %v1278 = vadd.f32 %v1270, %v356
      %v1279 = vadd.f32 %v1271, %v357
      %v1280 = vadd.f32 %v1272, %v358
      %v1281 = vadd.f32 %v1273, %v359
      %v1282 = vadd.f32 %v1274, %v360
      %v1283 = vadd.f32 %v1275, %v361
      %v1284 = vadd.f32 %v1276, %v362
      %v1285 = vadd.f32 %v1277, %v1243
      %v1286 = vadd.f32 %v1278, %v1245
      %v1287 = vadd.f32 %v1279, %v1247
      %v1288 = vadd.f32 %v1280, %v1249
      %v1289 = vadd.f32 %v1281, %v1253
      %v1290 = vadd.f32 %v1282, %v1255
      %v1291 = vadd.f32 %v1283, %v1257
      %v1292 = vadd.f32 %v1284, %v1259
      %1293 = vst [vmem:[%s353] sm:$0xff] %v1285
      %1294 = vst [vmem:[%s353 + $0x8] sm:$0xff] %v1286
      %1295 = vst [vmem:[%s353 + $0x10] sm:$0xff] %v1287
      %1296 = vst [vmem:[%s353 + $0x18] sm:$0xff] %v1288
      %1297 = vst [vmem:[%s353 + $0x20] sm:$0xff] %v1289
      %1298 = vst [vmem:[%s353 + $0x28] sm:$0xff] %v1290
      %1299 = vst [vmem:[%s353 + $0x30] sm:$0xff] %v1291
      %1300 = vst [vmem:[%s353 + $0x38] sm:$0xff] %v1292
      %p1301 = scmp.lt.s32.totalorder %s21, 1
      %s1302 = scalar_select %p1301, %s21, 1
      %s1303 = smul.addr %s1302, 8
      %s1304 = smul.addr %s1303, 8
      %s1305 = scalar_lea.vmem %s9, %s1304
      // Predicated region
      $region57: #{csam_block432.1} parent=55 // pred_check
        %p1306 = pneg %p238
      $region58: #{csam_block432.1} parent=55 // pred_check_branch
        %1308 = sbr.rel (%p1306) target = $region60
      $region59: #{csam_block432.1} parent=55 // pred_region
        _
      $region60: #{csam_block432.1} parent=55 // pred_fallthru
        _
    $region56: #{csam_block432.1} parent=5 // pred_fallthru
      _
    %p1309 = scmp.le.s32.totalorder 2, %s16
    // Predicated region
    $region61: #{csam_block432.1} parent=5 // pred_check
      %p1310 = pneg %p1309
    $region62: #{csam_block432.1} parent=5 // pred_check_branch
      %1312 = sbr.rel (%p1310) target = $region64
    $region63: #{csam_block432.1} parent=5 // pred_region
      %s1313 = ssub.s32 %s16, 2
      // Predicated region
      $region65: #{csam_block432.1} parent=63 // pred_check
        %p1314 = pneg %p244
      $region66: #{csam_block432.1} parent=63 // pred_check_branch
        %1316 = sbr.rel (%p1314) target = $region68
      $region67: #{csam_block432.1} parent=63 // pred_region
        %p1317 = scmp.lt.s32.totalorder %s22, 1
        %s1318 = scalar_select %p1317, %s22, 1
        %s1319 = smul.addr %s1318, 8
        %s1320 = smul.addr %s1319, 8
        %s1321 = scalar_lea.vmem %s9, %s1320
      $region68: #{csam_block432.1} parent=63 // pred_fallthru
        _
    $region64: #{csam_block432.1} parent=5 // pred_fallthru
      _
  $region6: #{csam_block432.1} parent=0 // loop_footer
    %s20 = sadd.s32 1, %s16
  $region7: #{csam_block432.1} parent=0 // loop_footer_branch
    %15 = sbr.rel target = $region3
  $region8: #{csam_block432.1} parent=0 // loop_exit
    _

</llo_original>
